<compile_context>
chip_gen: v5e
topology: v5e:2x2
jax: 0.10.0
libtpu: 0.0.40
codegen_flags: <defaults>
</compile_context>

<pallas_src>
import functools
import math

import jax
import jax.numpy as jnp
from jax.experimental import pallas as pl
from jax.experimental.pallas import tpu as pltpu

LANES = 128
MAX_BLOCK_ROWS = 2048   # (2048, 128) f32 = 1 MiB per input block
NSLABS = 2              # leading "parallel" axis (v7x: one slab per TensorCore)

_LOG2 = math.log(2.0)


def _ceil_div(a, b):
    return -(-a // b)


def _softplus(v):
    # stable log(1 + exp(v)): max goes to VPU, the log arg stays in [1, 2]
    return jnp.maximum(v, 0.0) + jnp.log(1.0 + jnp.exp(-jnp.abs(v)))


def _qloss_elem(v, divergence):
    """-Conjugate_f(Activation_g(v)) in closed form (computed in f32)."""
    if divergence == "KLD":
        return -jnp.exp(v - 1.0)
    elif divergence == "RKL":
        return 1.0 - v
    elif divergence == "CHI":
        return -(0.25 * v * v + v)
    elif divergence == "SQH":
        return 1.0 - jnp.exp(v)
    elif divergence == "JSD":
        return jnp.float32(_LOG2) - _softplus(v)
    elif divergence == "GAN":
        return -_softplus(v)
    else:
        raise ValueError(f"unknown divergence: {divergence}")


def _elem_at_zero(divergence):
    """Per-element loss at v == 0 (used to correct for zero padding)."""
    return {
        "KLD": -math.exp(-1.0),
        "RKL": 1.0,
        "CHI": 0.0,
        "SQH": 0.0,
        "JSD": 0.0,
        "GAN": -_LOG2,
    }[divergence]


def _qloss_kernel(v_ref, o_ref, *, divergence):
    i = pl.program_id(1)

    @pl.when(i == 0)
    def _():
        o_ref[...] = jnp.zeros_like(o_ref)

    x = v_ref[...].astype(jnp.float32)
    e = _qloss_elem(x, divergence)
    # (block_rows, 128) -> (block_rows // 8, 8, 128); summing the leading axis
    # is plain vreg adds on the VPU -- no cross-lane reduce in steady state.
    e = e.reshape(x.shape[0] // 8, 8, LANES)
    o_ref[...] += jnp.sum(e, axis=0)


def qloss(v, divergence="JSD"):
    """mean(-Conjugate_f(Activation_g(v))) over all elements of v."""
    n_valid = int(math.prod(v.shape))
    rows = _ceil_div(n_valid, LANES)
    block_rows = min(MAX_BLOCK_ROWS, _ceil_div(rows, 8) * 8)
    rows_padded = _ceil_div(rows, block_rows * NSLABS) * block_rows * NSLABS
    blocks_per_slab = rows_padded // (block_rows * NSLABS)
    n_padded = rows_padded * LANES
    n_pad = n_padded - n_valid

    flat = jnp.reshape(v, (-1,))
    if n_pad:
        flat = jnp.pad(flat, (0, n_pad))
    v2d = jnp.reshape(flat, (rows_padded, LANES))

    kernel = functools.partial(_qloss_kernel, divergence=divergence)

    partials = pl.pallas_call(
        kernel,
        out_shape=jax.ShapeDtypeStruct((NSLABS * 8, LANES), jnp.float32),
        grid_spec=pltpu.PrefetchScalarGridSpec(
            num_scalar_prefetch=0,
            grid=(NSLABS, blocks_per_slab),
            in_specs=[pl.BlockSpec(
                (block_rows, LANES),
                lambda c, i: (c * blocks_per_slab + i, 0))],
            out_specs=pl.BlockSpec((8, LANES), lambda c, i: (c, 0)),
        ),
        compiler_params=pltpu.CompilerParams(
            dimension_semantics=("parallel", "arbitrary")),
    )(v2d)

    total = jnp.sum(partials)
    total = total - jnp.float32(n_pad * _elem_at_zero(divergence))
    return total / jnp.float32(n_valid)


# ----------------------- pure-JAX reference (PyTorch-faithful) ---------------

def _activation_g_ref(v, d):
    if d == "KLD":
        return v
    if d == "RKL":
        return -jnp.exp(-v)
    if d == "CHI":
        return v
    if d == "SQH":
        return 1.0 - jnp.exp(-v)
    if d == "JSD":
        return jnp.float32(_LOG2) - jnp.log(1.0 + jnp.exp(-v))
    if d == "GAN":
        return -jnp.log(1.0 + jnp.exp(-v))
    raise ValueError(d)


def _conjugate_f_ref(t, d):
    if d == "KLD":
        return jnp.exp(t - 1.0)
    if d == "RKL":
        return -1.0 - jnp.log(-t)
    if d == "CHI":
        return 0.25 * t * t + t
    if d == "SQH":
        return t / (1.0 - t)
    if d == "JSD":
        return -jnp.log(2.0 - jnp.exp(t))
    if d == "GAN":
        return -jnp.log(1.0 - jnp.exp(t))
    raise ValueError(d)


def _qloss_ref(v, d):
    v = v.astype(jnp.float32)
    return jnp.mean(-_conjugate_f_ref(_activation_g_ref(v, d), d))


if __name__ == "__main__":
    key = jax.random.PRNGKey(0)
    # Small discriminator-output-like tensor (NCHW).
    x = jax.random.normal(key, (2, 4, 16, 16), dtype=jnp.float32)

    ok = True
    for div in ["KLD", "RKL", "CHI", "SQH", "JSD", "GAN"]:
        got = jax.block_until_ready(qloss(x, divergence=div))
        want = _qloss_ref(x, div)
        if not jnp.allclose(got, want, rtol=1e-4, atol=1e-4):
            ok = False
            print(f"MISMATCH {div}: got={got} want={want}")

    if ok:
        print("KERNEL_OK")
</pallas_src>

<mosaic_0001>
module attributes {stable_mosaic.version = 11 : i64} {
  func.func @_qloss_kernel(%arg0: i32, %arg1: i32, %arg2: memref<16x128xf32, #tpu.memory_space<vmem>>, %arg3: memref<8x128xf32, #tpu.memory_space<vmem>>) attributes {dimension_semantics = [#tpu.dimension_semantics<parallel>, #tpu.dimension_semantics<arbitrary>], iteration_bounds = array<i64: 2, 1>, scalar_prefetch = 0 : i64, scratch_operands = 0 : i64, tpu.core_type = #tpu.core_type<tc>, window_params = [{transform_indices = @transform_0, window_bounds = array<i64: 16, 128>}, {transform_indices = @transform_1, window_bounds = array<i64: 8, 128>}]} {
    %c0_i32 = arith.constant 0 : i32
    %0 = arith.cmpi eq, %arg1, %c0_i32 : i32
    %1 = arith.extui %0 : i1 to i32
    %c0_i32_0 = arith.constant 0 : i32
    %2 = arith.cmpi ne, %1, %c0_i32_0 : i32
    scf.if %2 {
      %cst_8 = arith.constant 0.000000e+00 : f32
      %14 = vector.broadcast %cst_8 : f32 to vector<8x128xf32>
      %c0_9 = arith.constant 0 : index
      %c0_10 = arith.constant 0 : index
      %15 = vector.load %arg3[%c0_9, %c0_10] : memref<8x128xf32, #tpu.memory_space<vmem>>, vector<8x128xf32>
      tpu.vector_store %arg3[%c0_9, %c0_10], %14 {strides = array<i32>} : memref<8x128xf32, #tpu.memory_space<vmem>>, vector<8x128xf32>,
    } else {
    }
    %c0 = arith.constant 0 : index
    %c0_1 = arith.constant 0 : index
    %3 = vector.load %arg2[%c0, %c0_1] : memref<16x128xf32, #tpu.memory_space<vmem>>, vector<16x128xf32>
    %cst = arith.constant 1.000000e+00 : f32
    %4 = vector.broadcast %cst : f32 to vector<16x128xf32>
    %5 = arith.subf %3, %4 : vector<16x128xf32>
    %6 = math.exp %5 : vector<16x128xf32>
    %cst_2 = arith.constant 0.000000e+00 : f32
    %7 = vector.broadcast %cst_2 : f32 to vector<16x128xf32>
    %8 = arith.subf %7, %6 : vector<16x128xf32>
    %9 = vector.shape_cast %8 : vector<16x128xf32> to vector<2x8x128xf32>
    %c0_3 = arith.constant 0 : index
    %c0_4 = arith.constant 0 : index
    %10 = vector.load %arg3[%c0_3, %c0_4] : memref<8x128xf32, #tpu.memory_space<vmem>>, vector<8x128xf32>
    %cst_5 = arith.constant dense<0.000000e+00> : vector<8x128xf32>
    %11 = vector.multi_reduction <add>, %9, %cst_5 [0] : vector<2x8x128xf32> to vector<8x128xf32>
    %12 = arith.addf %10, %11 : vector<8x128xf32>
    %c0_6 = arith.constant 0 : index
    %c0_7 = arith.constant 0 : index
    %13 = vector.load %arg3[%c0_6, %c0_7] : memref<8x128xf32, #tpu.memory_space<vmem>>, vector<8x128xf32>
    tpu.vector_store %arg3[%c0_6, %c0_7], %12 {strides = array<i32>} : memref<8x128xf32, #tpu.memory_space<vmem>>, vector<8x128xf32>,
    return
  }
  func.func @transform_0(%arg0: i32, %arg1: i32) -> (i32, i32) {
    %c1_i32 = arith.constant 1 : i32
    %0 = arith.muli %arg0, %c1_i32 : i32
    %1 = arith.addi %0, %arg1 : i32
    %c0_i32 = arith.constant 0 : i32
    %c0_i32_0 = arith.constant 0 : i32
    return %1, %c0_i32 : i32, i32
  }
  func.func @transform_1(%arg0: i32, %arg1: i32) -> (i32, i32) {
    %c0_i32 = arith.constant 0 : i32
    %c0_i32_0 = arith.constant 0 : i32
    return %arg0, %c0_i32 : i32, i32
  }
}

</mosaic_0001>

<llo_original>
// kernel: tpu_custom_call.1
$region0: #{tpu_custom_call.1}
  #allocation0 [shape = 'u32[]', space=smem, size = 0x4, offset = 0x4, fixed_abs, tag = 'smem constant byte address 0x4 - core index']
  #allocation1 [shape = 'u32[72,128]{1,0:T(1,128)}', space=vmem, size = 0x9000, scoped, tag = 'internal scratch']
  %s0 = inlined_call_operand.hbm [shape: f32[32,128], index: 0, kind: input, shape index: {}]
  %s1 = inlined_call_operand.hbm [shape: f32[16,128], index: 1, kind: output, shape index: {}]
  %s2 = sld [smem:[#allocation0]]
  $region45: #{tpu_custom_call.1} parent=0
    _
  %s4 = ssub.s32 1, %s2
  %s5 = scalar_select 0, %s4, %s2
  $region1: #{tpu_custom_call.1} parent=0
    #allocation2 [shape = 'u8[16384]{0}', space=vmem, size = 0x4000, scoped, tag = 'input window, operand 0']
    #allocation3 [shape = 's32[2]{0}', space=sflag, size = 0x8, scoped, tag = 'scoped memory for tpu_custom_call.1']
    #allocation4 [shape = 's32[2]{0}', space=sflag, size = 0x8, scoped, tag = 'scoped memory for tpu_custom_call.1']
    #allocation5 [shape = 'u8[8192]{0}', space=vmem, size = 0x2000, scoped, tag = 'output window, operand 0']
    %6 = vsyncpa [#allocation3], 0
    %s7 = scalar_lea.sflag [#allocation3], 1
    %8 = vsyncpa %s7, 0
    %9 = vsyncpa [#allocation4], 0
    %s10 = scalar_lea.sflag [#allocation4], 1
    %11 = vsyncpa %s10, 0
    loop: start=0, step=1, limit=4
    $region2: #{tpu_custom_call.1} parent=1 // loop_pre_header
      _
    $region3: #{tpu_custom_call.1} parent=1 // loop_header
      %s13 = sphi 0, %s17
      %p14 = scmp.ge.s32.totalorder %s13, 4
      %s20 = sphi 0, %s32
      %s21 = sphi 0, %s28
      %s22 = sphi 0, %s20
      %s23 = sphi 0, %s21
      %s24 = sphi 0, %s22
      %s25 = sphi 0, %s23
      %s37 = sphi 0, %s39
      %s40 = sphi 0, %s37
      %s41 = sphi 0, %s40
      %s57 = sphi 0, %s41
      %s63 = sphi 0, %s65
      %s66 = sphi 0, %s63
      %s67 = sphi 0, %s66
      %s83 = sphi 0, %s67
    $region4: #{tpu_custom_call.1} parent=1 // loop_header_branch
      %16 = sbr.rel (%p14) target = $region8
    $region5: #{tpu_custom_call.1} parent=1 // loop_body
      %s18 = ssub.s32 %s13, 1
      %s19 = ssub.s32 %s13, 2
      %s26 = sadd.s32 1, %s21
      %p27 = scmp.ge.s32.totalorder %s26, 1
      %s28 = scalar_select %p27, 0, %s26
      %s29 = sadd.s32 1, %s20
      %s30 = scalar_select %p27, %s29, %s20
      %p31 = scmp.ge.s32.totalorder %s30, 2
      %s32 = scalar_select %p31, 0, %s30
      %s33 = sadd.s32 %s20, %s21
      %s34 = sadd.s32 %s32, %s28
      %s35 = ssub.s32 %s33, %s34
      %p36 = scmp.eq.s32.totalorder %s35, 0
      %s38 = sadd.s32 %s37, 1
      %s39 = scalar_select %p36, %s37, %s38
      %p42 = pneg %p36
      %p43 = scmp.eq.s32.totalorder %s13, 1
      %p44 = por %p42, %p43
      %p45 = scmp.ne.s32.totalorder %s37, %s40
      %p46 = scmp.eq.s32.totalorder %s13, 0
      %p47 = por %p45, %p46
      %p48 = scmp.ne.s32.totalorder %s37, %s40
      %p49 = scmp.eq.s32.totalorder %s18, 1
      %p50 = por %p48, %p49
      %p51 = scmp.ne.s32.totalorder %s40, %s41
      %p52 = scmp.eq.s32.totalorder %s18, 0
      %p53 = por %p51, %p52
      %p54 = scmp.ne.s32.totalorder %s40, %s41
      %p55 = scmp.eq.s32.totalorder %s19, 1
      %p56 = por %p54, %p55
      %p58 = scmp.ne.s32.totalorder %s41, %s57
      %p59 = scmp.eq.s32.totalorder %s19, 0
      %p60 = por %p58, %p59
      %s61 = ssub.s32 %s20, %s32
      %p62 = scmp.eq.s32.totalorder %s61, 0
      %s64 = sadd.s32 %s63, 1
      %s65 = scalar_select %p62, %s63, %s64
      %p68 = pneg %p62
      %p69 = scmp.eq.s32.totalorder %s13, 1
      %p70 = por %p68, %p69
      %p71 = scmp.ne.s32.totalorder %s63, %s66
      %p72 = scmp.eq.s32.totalorder %s13, 0
      %p73 = por %p71, %p72
      %p74 = scmp.ne.s32.totalorder %s63, %s66
      %p75 = scmp.eq.s32.totalorder %s18, 1
      %p76 = por %p74, %p75
      %p77 = scmp.ne.s32.totalorder %s66, %s67
      %p78 = scmp.eq.s32.totalorder %s18, 0
      %p79 = por %p77, %p78
      %p80 = scmp.ne.s32.totalorder %s66, %s67
      %p81 = scmp.eq.s32.totalorder %s19, 1
      %p82 = por %p80, %p81
      %p84 = scmp.ne.s32.totalorder %s67, %s83
      %p85 = scmp.eq.s32.totalorder %s19, 0
      %p86 = por %p84, %p85
      %p87 = scmp.le.s32.totalorder 1, %s13
      %p88 = scmp.lt.s32.totalorder %s13, 3
      %p89 = pnand %p87, %p88
      %p90 = pneg %p89
      // Predicated region
      $region9: #{tpu_custom_call.1} parent=5 // pred_check
        _
      $region10: #{tpu_custom_call.1} parent=5 // pred_check_branch
        %92 = sbr.rel (%p89) target = $region12
      $region11: #{tpu_custom_call.1} parent=5 // pred_region
        %s93 = ssub.s32 %s13, 1
      $region12: #{tpu_custom_call.1} parent=5 // pred_fallthru
        _
      %p94 = scmp.lt.s32.totalorder %s13, 2
      // Predicated region
      $region13: #{tpu_custom_call.1} parent=5 // pred_check
        %p95 = pneg %p94
      $region14: #{tpu_custom_call.1} parent=5 // pred_check_branch
        %97 = sbr.rel (%p95) target = $region16
      $region15: #{tpu_custom_call.1} parent=5 // pred_region
        // Predicated region
        $region17: #{tpu_custom_call.1} parent=15 // pred_check
          %p98 = pneg %p47
        $region18: #{tpu_custom_call.1} parent=15 // pred_check_branch
          %100 = sbr.rel (%p98) target = $region20
        $region19: #{tpu_custom_call.1} parent=15 // pred_region
          %s101 = sand.u32 %s37, 1
          %s102 = scalar_lea.sflag [#allocation3], %s101
          %s103 = sand.u32 %s37, 1
          %s104 = smul.addr %s103, 16
          %s105 = scalar_lea.vmem [#allocation2], %s104
          %s106 = sadd.s32 %s20, %s21
          %s107 = smul.u32 2, %s106
          %109 = vsyncadd %s102, 0
          %s110 = smul.addr %s107, 8
          %s111 = scalar_lea.hbm %s0, %s110
          %s112 = sshll.u32 %s111, 4
          %s113 = int_to_ptr.hbm [resolvable:$true] %s112
          %s114 = sshll.u32 %s105, 4
          %s115 = int_to_ptr.vmem [resolvable:$true] %s114
          %120 = dma.hbm_to_vmem [thread:$0]  %s113, 256, %s115, %s102, 128, 128, 8
        $region20: #{tpu_custom_call.1} parent=15 // pred_fallthru
          _
      $region16: #{tpu_custom_call.1} parent=5 // pred_fallthru
        _
      %p121 = scmp.le.s32.totalorder 1, %s13
      %p122 = scmp.lt.s32.totalorder %s13, 3
      %p123 = pnand %p121, %p122
      %p124 = pneg %p123
      // Predicated region
      $region21: #{tpu_custom_call.1} parent=5 // pred_check
        _
      $region22: #{tpu_custom_call.1} parent=5 // pred_check_branch
        %126 = sbr.rel (%p123) target = $region24
      $region23: #{tpu_custom_call.1} parent=5 // pred_region
        %s127 = ssub.s32 %s13, 1
        %s128 = sand.u32 %s40, 1
        %s129 = scalar_lea.sflag [#allocation3], %s128
        %s130 = sand.u32 %s40, 1
        %s131 = smul.addr %s130, 16
        %s132 = scalar_lea.vmem [#allocation2], %s131
        // Predicated region
        $region25: #{tpu_custom_call.1} parent=23 // pred_check
          %p133 = pneg %p53
        $region26: #{tpu_custom_call.1} parent=23 // pred_check_branch
          %135 = sbr.rel (%p133) target = $region28
        $region27: #{tpu_custom_call.1} parent=23 // pred_region
          %137 = dma.done %s129, 256
        $region28: #{tpu_custom_call.1} parent=23 // pred_fallthru
          _
        %s138 = sand.u32 %s40, 1
        %s139 = scalar_lea.sflag [#allocation3], %s138
        %s140 = sand.u32 %s40, 1
        %s141 = smul.addr %s140, 16
        %s142 = scalar_lea.vmem [#allocation2], %s141
        %p143 = pneg %p53
        %p144 = pneg %p50
        %p145 = pneg %p79
        %p146 = pneg %p76
        %s147 = sand.u32 %s66, 1
        %s148 = scalar_lea.sflag [#allocation4], %s147
        %s149 = sand.u32 %s66, 1
        %s150 = smul.addr %s149, 8
        %s151 = scalar_lea.vmem [#allocation5], %s150
        %s152 = sadd.s32 %s22, %s23
        %s153 = smul.u32 2, %s152
        %p154 = scmp.eq.s32.totalorder %s23, 0
        // Predicated region
        $region29: #{tpu_custom_call.1} parent=23 // pred_check
          %p155 = pneg %p154
        $region30: #{tpu_custom_call.1} parent=23 // pred_check_branch
          %157 = sbr.rel (%p155) target = $region32
        $region31: #{tpu_custom_call.1} parent=23 // pred_region
          %158 = vst [vmem:[%s151] sm:$0xff] 0.0
        $region32: #{tpu_custom_call.1} parent=23 // pred_fallthru
          _
        %v159 = vld [vmem:[%s132] sm:$0xff]
        %v160 = vld [vmem:[%s132 + $0x8] sm:$0xff]
        %v161 = vsub.f32 %v159, 1.0
        %v162 = vsub.f32 %v160, 1.0
        %v163 = vmul.f32 %v161, 1.442695
        %v164 = vpow.pop %v163
        %v165 = vmul.f32 %v162, 1.442695
        %v166 = vpow.pop %v165
        %v167 = vsub.f32 0.0, %v164
        %v168 = vsub.f32 0.0, %v166
        %v169 = vld [vmem:[%s151] sm:$0xff]
        %v170 = vadd.f32 %v167, %v168
        %v171 = vadd.f32 %v169, %v170
        %172 = vst [vmem:[%s151] sm:$0xff] %v171
        %s173 = sand.u32 %s66, 1
        %s174 = scalar_lea.sflag [#allocation4], %s173
        %s175 = sand.u32 %s66, 1
        %s176 = smul.addr %s175, 8
        %s177 = scalar_lea.vmem [#allocation5], %s176
        // Predicated region
        $region33: #{tpu_custom_call.1} parent=23 // pred_check
          %p178 = pneg %p76
        $region34: #{tpu_custom_call.1} parent=23 // pred_check_branch
          %180 = sbr.rel (%p178) target = $region36
        $region35: #{tpu_custom_call.1} parent=23 // pred_region
          %182 = vsyncadd %s174, 0
          %s183 = smul.addr %s22, 8
          %s184 = scalar_lea.hbm %s1, %s183
          %s186 = sshll.u32 %s177, 4
          %s187 = int_to_ptr.vmem [resolvable:$true] %s186
          %s188 = sshll.u32 %s184, 4
          %s189 = int_to_ptr.hbm [resolvable:$true] %s188
          %191 = dma.vmem_to_hbm [thread:$0]  %s187, 128, %s189, %s174
        $region36: #{tpu_custom_call.1} parent=23 // pred_fallthru
          _
      $region24: #{tpu_custom_call.1} parent=5 // pred_fallthru
        _
      %p192 = scmp.le.s32.totalorder 2, %s13
      // Predicated region
      $region37: #{tpu_custom_call.1} parent=5 // pred_check
        %p193 = pneg %p192
      $region38: #{tpu_custom_call.1} parent=5 // pred_check_branch
        %195 = sbr.rel (%p193) target = $region40
      $region39: #{tpu_custom_call.1} parent=5 // pred_region
        %s196 = ssub.s32 %s13, 2
        // Predicated region
        $region41: #{tpu_custom_call.1} parent=39 // pred_check
          %p197 = pneg %p82
        $region42: #{tpu_custom_call.1} parent=39 // pred_check_branch
          %199 = sbr.rel (%p197) target = $region44
        $region43: #{tpu_custom_call.1} parent=39 // pred_region
          %s200 = sand.u32 %s67, 1
          %s201 = scalar_lea.sflag [#allocation4], %s200
          %s202 = sand.u32 %s67, 1
          %s203 = smul.addr %s202, 8
          %s204 = scalar_lea.vmem [#allocation5], %s203
          %206 = dma.done %s201, 128
        $region44: #{tpu_custom_call.1} parent=39 // pred_fallthru
          _
      $region40: #{tpu_custom_call.1} parent=5 // pred_fallthru
        _
    $region6: #{tpu_custom_call.1} parent=1 // loop_footer
      %s17 = sadd.s32 1, %s13
    $region7: #{tpu_custom_call.1} parent=1 // loop_footer_branch
      %12 = sbr.rel target = $region3
    $region8: #{tpu_custom_call.1} parent=1 // loop_exit
      _
    %207 = vsyncpa [#allocation3], 1
    %s208 = scalar_lea.sflag [#allocation3], 1
    %209 = vsyncpa %s208, 1
    %210 = vsyncpa [#allocation4], 1
    %s211 = scalar_lea.sflag [#allocation4], 1
    %212 = vsyncpa %s211, 1

</llo_original>
